<compile_context>
chip_gen: v7x
topology: tpu7x:2x2x1
jax: 0.10.0
libtpu: 0.0.40
codegen_flags: <defaults>
</compile_context>

<pallas_src>
import functools

import jax
import jax.numpy as jnp
from jax.experimental import pallas as pl
from jax.experimental.pallas import tpu as pltpu


def _round_up(x, m):
    return ((x + m - 1) // m) * m


# --------------------------------------------------------------------------
# Kernel
# --------------------------------------------------------------------------
def _graph_agg_kernel(x_ref, w_ref, b_ref, o_ref, *, n_nodes, f_pad):
    # x_ref: (TB, N, D) bf16; w_ref: (D, 2*Fp) bf16; b_ref: (1, 2*Fp) f32
    # o_ref: (TB, Fp) f32
    tb = x_ref.shape[0]
    d = x_ref.shape[2]

    # Contiguous leading-dim collapse (no lane crossing): (TB, N, D) -> (TB*N, D)
    x = x_ref[...].reshape(tb * n_nodes, d)

    # One fused MXU pass for both branches; accumulate in f32.
    logits = jnp.dot(x, w_ref[...], preferred_element_type=jnp.float32)
    logits = logits + b_ref[...]                       # (TB*N, 2*Fp) f32

    # Elementwise math in f32 (v5e-safe). EUP is the binding unit here;
    # the multiply (VALU) and node-sum (XLU) are free filler under EUP slack.
    i = jax.nn.sigmoid(logits[:, :f_pad])              # (TB*N, Fp)
    j = jnp.tanh(logits[:, f_pad:])                    # (TB*N, Fp)

    prod = (i * j).reshape(tb, n_nodes, f_pad)         # leading-dim split
    o_ref[...] = jnp.sum(prod, axis=1).astype(o_ref.dtype)  # (TB, Fp)


# --------------------------------------------------------------------------
# One-time parameter preparation (hoisted out of the hot call path)
# --------------------------------------------------------------------------
def prepare_graph_agg_params(w_sig, b_sig, w_tanh, b_tanh):
    """w_*: [F, D] (PyTorch Linear layout); b_*: [F].

    Returns (w_fused[D, 2*Fp] bf16, b_fused[1, 2*Fp] f32, F, Fp).
    Zero-padded feature columns give sigmoid(0)*tanh(0)=0 contributions and are
    sliced away after the kernel, so semantics are unchanged.
    """
    F, D = w_sig.shape
    f_pad = _round_up(max(F, 128), 128)

    def pad_wt(w):
        wt = jnp.asarray(w, jnp.float32).T                       # (D, F)
        return jnp.pad(wt, ((0, 0), (0, f_pad - F)))             # (D, Fp)

    def pad_b(b):
        return jnp.pad(jnp.asarray(b, jnp.float32), (0, f_pad - F))

    w_fused = jnp.concatenate([pad_wt(w_sig), pad_wt(w_tanh)], axis=1)  # (D, 2*Fp)
    b_fused = jnp.concatenate([pad_b(b_sig), pad_b(b_tanh)]).reshape(1, 2 * f_pad)
    return w_fused.astype(jnp.bfloat16), b_fused, F, f_pad


# --------------------------------------------------------------------------
# TB selection: fill the MXU M dim, stay inside a conservative VMEM budget
# (valid for v7x's 64 MiB as well as v5e/v6e's 128 MiB physical VMEM).
# --------------------------------------------------------------------------
def _choose_tb(B, N, D, f_pad):
    target_rows = 1024                                   # TB*N ~ 512-1024
    tb = max(1, target_rows // max(N, 1))
    vmem_budget = 16 * 1024 * 1024
    # double-buffered bf16 x block + f32 intermediates (logits/acts/products)
    per_graph = 2 * (2 * N * D) + 4 * (4 * N * 2 * f_pad)
    tb = min(tb, max(1, vmem_budget // max(per_graph, 1)))
    tb = max(8, (tb // 8) * 8)                           # sublane-aligned output block
    tb = min(tb, _round_up(B, 8))
    return tb


# --------------------------------------------------------------------------
# Wrapper
# --------------------------------------------------------------------------
def graph_aggregation_prepared(x, w_fused, b_fused, out_features, f_pad,
                               activation=None):
    """x: [B, N, D]; w_fused: [D, 2*Fp] bf16; b_fused: [1, 2*Fp] f32."""
    B, N, D = x.shape
    two_fp = w_fused.shape[1]
    assert two_fp == 2 * f_pad

    tb = _choose_tb(B, N, D, f_pad)
    b_pad = _round_up(B, tb)

    x_bf16 = jnp.asarray(x, jnp.bfloat16)
    if b_pad != B:
        x_bf16 = jnp.pad(x_bf16, ((0, b_pad - B), (0, 0), (0, 0)))

    kernel = functools.partial(_graph_agg_kernel, n_nodes=N, f_pad=f_pad)

    out = pl.pallas_call(
        kernel,
        out_shape=jax.ShapeDtypeStruct((b_pad, f_pad), jnp.float32),
        grid_spec=pltpu.PrefetchScalarGridSpec(
            num_scalar_prefetch=0,
            grid=(b_pad // tb,),
            in_specs=[
                # x: TB graphs per step; last two dims full-extent (N, D).
                pl.BlockSpec((tb, N, D), lambda b: (b, 0, 0)),
                # Fused, padded weight & bias: resident across all steps.
                pl.BlockSpec((D, two_fp), lambda b: (0, 0)),
                pl.BlockSpec((1, two_fp), lambda b: (0, 0)),
            ],
            out_specs=pl.BlockSpec((tb, f_pad), lambda b: (b, 0)),
        ),
        compiler_params=pltpu.CompilerParams(
            dimension_semantics=("parallel",),
            vmem_limit_bytes=32 * 1024 * 1024,
        ),
    )(x_bf16, w_fused, b_fused)

    out = out[:B, :out_features]
    if activation is not None:
        out = activation(out)
    # Dropout(rate=0) in eval mode is the identity.
    return out


def graph_aggregation(x, w_sig, b_sig, w_tanh, b_tanh, activation=None):
    """Convenience path: prepares params then calls the kernel."""
    w_fused, b_fused, F, f_pad = prepare_graph_agg_params(w_sig, b_sig, w_tanh, b_tanh)
    return graph_aggregation_prepared(x, w_fused, b_fused, F, f_pad, activation)


def _reference(x, w_sig, b_sig, w_tanh, b_tanh, activation=None):
    i = jax.nn.sigmoid(jnp.einsum("bnd,fd->bnf", x, w_sig) + b_sig)
    j = jnp.tanh(jnp.einsum("bnd,fd->bnf", x, w_tanh) + b_tanh)
    out = jnp.sum(i * j, axis=1)
    if activation is not None:
        out = activation(out)
    return out


if __name__ == "__main__":
    # Small shapes consistent with the module: B graphs, N nodes,
    # in_features + n_dim input features, out_features outputs.
    B, N = 2, 8
    in_features, n_dim, out_features = 32, 4, 32
    D = in_features + n_dim
    F = out_features

    key = jax.random.PRNGKey(0)
    kx, kws, kbs, kwt, kbt = jax.random.split(key, 5)

    bound = 1.0 / jnp.sqrt(jnp.float32(D))
    x = jax.random.normal(kx, (B, N, D), jnp.float32)
    w_sig = jax.random.uniform(kws, (F, D), jnp.float32, -bound, bound)
    b_sig = jax.random.uniform(kbs, (F,), jnp.float32, -bound, bound)
    w_tanh = jax.random.uniform(kwt, (F, D), jnp.float32, -bound, bound)
    b_tanh = jax.random.uniform(kbt, (F,), jnp.float32, -bound, bound)

    # One-time param preparation (hoisted out of the per-call path).
    w_fused, b_fused, _, f_pad = prepare_graph_agg_params(w_sig, b_sig, w_tanh, b_tanh)

    out = graph_aggregation_prepared(x, w_fused, b_fused, F, f_pad, activation=None)
    out = jax.block_until_ready(out)

    ref = _reference(x, w_sig, b_sig, w_tanh, b_tanh, activation=None)
    assert out.shape == (B, F)
    # bf16 MXU operands -> loosened tolerance vs. the f32 reference.
    assert jnp.allclose(out, ref, atol=2e-2, rtol=2e-2), "mismatch vs reference"

    print("KERNEL_OK")
</pallas_src>

<mosaic_0001>
module attributes {stable_mosaic.version = 11 : i64} {
  func.func @_graph_agg_kernel(%arg0: i32, %arg1: memref<8x8x36xbf16, #tpu.memory_space<vmem>>, %arg2: memref<36x256xbf16, #tpu.memory_space<vmem>>, %arg3: memref<1x256xf32, #tpu.memory_space<vmem>>, %arg4: memref<8x128xf32, #tpu.memory_space<vmem>>) attributes {dimension_semantics = [#tpu.dimension_semantics<parallel>], iteration_bounds = array<i64: 1>, scalar_prefetch = 0 : i64, scratch_operands = 0 : i64, tpu.core_type = #tpu.core_type<tc>, window_params = [{transform_indices = @transform_0, window_bounds = array<i64: 8, 8, 36>}, {pipeline_mode = #tpu.pipeline_mode<synchronous>, transform_indices = @transform_1, window_bounds = array<i64: 36, 256>}, {pipeline_mode = #tpu.pipeline_mode<synchronous>, transform_indices = @transform_2, window_bounds = array<i64: 1, 256>}, {transform_indices = @transform_3, window_bounds = array<i64: 8, 128>}]} {
    %c0 = arith.constant 0 : index
    %c0_0 = arith.constant 0 : index
    %c0_1 = arith.constant 0 : index
    %0 = vector.load %arg1[%c0, %c0_0, %c0_1] : memref<8x8x36xbf16, #tpu.memory_space<vmem>>, vector<8x8x36xbf16>
    %1 = vector.shape_cast %0 : vector<8x8x36xbf16> to vector<64x36xbf16>
    %c0_2 = arith.constant 0 : index
    %c0_3 = arith.constant 0 : index
    %2 = vector.load %arg2[%c0_2, %c0_3] : memref<36x256xbf16, #tpu.memory_space<vmem>>, vector<36x256xbf16>
    %cst = arith.constant dense<0.000000e+00> : vector<64x256xf32>
    %3 = tpu.matmul %1, %2, %cst {dimension_numbers = #tpu.dot_dimension_numbers<[1], [0], [0], [1], [0, 0, 1, 1], [], []>} : vector<64x36xbf16>, vector<36x256xbf16>, vector<64x256xf32> -> vector<64x256xf32>
    %c0_4 = arith.constant 0 : index
    %c0_5 = arith.constant 0 : index
    %4 = vector.load %arg3[%c0_4, %c0_5] : memref<1x256xf32, #tpu.memory_space<vmem>>, vector<1x256xf32>
    %5 = vector.broadcast %4 : vector<1x256xf32> to vector<64x256xf32>
    %6 = arith.addf %3, %5 : vector<64x256xf32>
    %7 = vector.extract_strided_slice %6 {offsets = [0, 0], sizes = [64, 128], strides = [1, 1]} : vector<64x256xf32> to vector<64x128xf32>
    %8 = arith.negf %7 : vector<64x128xf32>
    %9 = math.exp %8 : vector<64x128xf32>
    %cst_6 = arith.constant 1.000000e+00 : f32
    %10 = vector.broadcast %cst_6 : f32 to vector<64x128xf32>
    %11 = arith.addf %10, %9 : vector<64x128xf32>
    %12 = arith.divf %10, %11 : vector<64x128xf32>
    %13 = vector.extract_strided_slice %6 {offsets = [0, 128], sizes = [64, 128], strides = [1, 1]} : vector<64x256xf32> to vector<64x128xf32>
    %14 = math.tanh %13 : vector<64x128xf32>
    %15 = arith.mulf %12, %14 : vector<64x128xf32>
    %16 = vector.shape_cast %15 : vector<64x128xf32> to vector<8x8x128xf32>
    %cst_7 = arith.constant dense<0.000000e+00> : vector<8x128xf32>
    %17 = vector.multi_reduction <add>, %16, %cst_7 [1] : vector<8x8x128xf32> to vector<8x128xf32>
    %c0_8 = arith.constant 0 : index
    %c0_9 = arith.constant 0 : index
    %18 = vector.load %arg4[%c0_8, %c0_9] : memref<8x128xf32, #tpu.memory_space<vmem>>, vector<8x128xf32>
    tpu.vector_store %arg4[%c0_8, %c0_9], %17 {strides = array<i32>} : memref<8x128xf32, #tpu.memory_space<vmem>>, vector<8x128xf32>,
    return
  }
  func.func @transform_0(%arg0: i32) -> (i32, i32, i32) {
    %c0_i32 = arith.constant 0 : i32
    %c0_i32_0 = arith.constant 0 : i32
    %c0_i32_1 = arith.constant 0 : i32
    return %arg0, %c0_i32, %c0_i32_0 : i32, i32, i32
  }
  func.func @transform_1(%arg0: i32) -> (i32, i32) {
    %c0_i32 = arith.constant 0 : i32
    %c0_i32_0 = arith.constant 0 : i32
    %c0_i32_1 = arith.constant 0 : i32
    return %c0_i32, %c0_i32_0 : i32, i32
  }
  func.func @transform_2(%arg0: i32) -> (i32, i32) {
    %c0_i32 = arith.constant 0 : i32
    %c0_i32_0 = arith.constant 0 : i32
    %c0_i32_1 = arith.constant 0 : i32
    return %c0_i32, %c0_i32_0 : i32, i32
  }
  func.func @transform_3(%arg0: i32) -> (i32, i32) {
    %c0_i32 = arith.constant 0 : i32
    %c0_i32_0 = arith.constant 0 : i32
    return %arg0, %c0_i32 : i32, i32
  }
}

</mosaic_0001>

<llo_original>
// kernel: tpu_custom_call.1
$region0: #{tpu_custom_call.1}
  #allocation0 [shape = 'u32[]', space=smem, size = 0x4, offset = 0x4, fixed_abs, tag = 'smem constant byte address 0x4 - core index']
  #allocation1 [shape = 'u32[144,128]{1,0:T(1,128)}', space=vmem, size = 0x12000, scoped, tag = 'internal scratch']
  %s0 = inlined_call_operand.hbm [shape: bf16[8,8,36], index: 0, kind: input, shape index: {}]
  %s1 = inlined_call_operand.hbm [shape: bf16[36,256], index: 1, kind: input, shape index: {}]
  %s2 = inlined_call_operand.vmem [shape: f32[1,256], index: 2, kind: input, shape index: {}]
  %s3 = inlined_call_operand.hbm [shape: f32[8,128], index: 3, kind: output, shape index: {}]
  %s4 = sld [smem:[#allocation0]]
  $region30: #{tpu_custom_call.1} parent=0
    _
  %s6 = ssub.s32 1, %s4
  %s7 = scalar_select 0, %s6, %s4
  $region1: #{tpu_custom_call.1} parent=0
    #allocation2 [shape = 'u8[16384]{0}', space=vmem, size = 0x4000, scoped, tag = 'input window, operand 0, single buffered']
    #allocation3 [shape = 's32[1]{0}', space=sflag, size = 0x4, scoped, tag = 'scoped memory for tpu_custom_call.1']
    #allocation4 [shape = 's32[1]{0}', space=sflag, size = 0x4, scoped, tag = 'scoped memory for tpu_custom_call.1']
    #allocation5 [shape = 'u8[20480]{0}', space=vmem, size = 0x5000, scoped, tag = 'input window, operand 1, single buffered']
    #allocation6 [shape = 's32[1]{0}', space=sflag, size = 0x4, scoped, tag = 'scoped memory for tpu_custom_call.1']
    #allocation7 [shape = 'u8[4096]{0}', space=vmem, size = 0x1000, scoped, tag = 'output window, operand 0, single buffered']
    %8 = vsyncpa [#allocation3], 0
    %9 = vsyncpa [#allocation6], 0
    %10 = vsyncpa [#allocation4], 0
    // Predicated region
    $region2: #{tpu_custom_call.1} parent=1 // pred_check
      _
    $region3: #{tpu_custom_call.1} parent=1 // pred_check_branch
      %12 = sbr.rel (0) target = $region5
    $region4: #{tpu_custom_call.1} parent=1 // pred_region
      %s14 = ssub.s32 512, 512
      %15 = vsyncadd [#allocation3], %s14
      %s16 = sshll.u32 [#allocation2], 4
      %s17 = int_to_ptr.vmem [resolvable:$true] %s16
      %22 = dma.hbm_to_vmem [thread:$0]  %s0, 512, %s17, [#allocation3], 64, 64, 4
    $region5: #{tpu_custom_call.1} parent=1 // pred_fallthru
      _
    // Predicated region
    $region6: #{tpu_custom_call.1} parent=1 // pred_check
      _
    $region7: #{tpu_custom_call.1} parent=1 // pred_check_branch
      %24 = sbr.rel (0) target = $region9
    $region8: #{tpu_custom_call.1} parent=1 // pred_region
      %s26 = ssub.s32 640, 640
      %27 = vsyncadd [#allocation6], %s26
      %s28 = sshll.u32 [#allocation5], 4
      %s29 = int_to_ptr.vmem [resolvable:$true] %s28
      %34 = dma.hbm_to_vmem [thread:$0]  %s1, 640, %s29, [#allocation6], 128, 128, 8
    $region9: #{tpu_custom_call.1} parent=1 // pred_fallthru
      _
    // Predicated region
    $region10: #{tpu_custom_call.1} parent=1 // pred_check
      _
    $region11: #{tpu_custom_call.1} parent=1 // pred_check_branch
      %36 = sbr.rel (0) target = $region13
    $region12: #{tpu_custom_call.1} parent=1 // pred_region
      _
    $region13: #{tpu_custom_call.1} parent=1 // pred_fallthru
      _
    // Predicated region
    $region14: #{tpu_custom_call.1} parent=1 // pred_check
      _
    $region15: #{tpu_custom_call.1} parent=1 // pred_check_branch
      %38 = sbr.rel (0) target = $region17
    $region16: #{tpu_custom_call.1} parent=1 // pred_region
      %39 = dma.done [#allocation3], 512
    $region17: #{tpu_custom_call.1} parent=1 // pred_fallthru
      _
    // Predicated region
    $region18: #{tpu_custom_call.1} parent=1 // pred_check
      _
    $region19: #{tpu_custom_call.1} parent=1 // pred_check_branch
      %41 = sbr.rel (0) target = $region21
    $region20: #{tpu_custom_call.1} parent=1 // pred_region
      %42 = dma.done [#allocation6], 640
    $region21: #{tpu_custom_call.1} parent=1 // pred_fallthru
      _
    %v44 = vld [vmem:[#allocation2] sm:$0xf]
    %v45 = vld [vmem:[#allocation2 + $0x4] sm:$0xf]
    %v46 = vld [vmem:[#allocation2 + $0x8] sm:$0xf]
    %v47 = vld [vmem:[#allocation2 + $0xc] sm:$0xf]
    %v48 = vld [vmem:[#allocation2 + $0x10] sm:$0xf]
    %v49 = vld [vmem:[#allocation2 + $0x14] sm:$0xf]
    %v50 = vld [vmem:[#allocation2 + $0x18] sm:$0xf]
    %v51 = vld [vmem:[#allocation2 + $0x1c] sm:$0xf]
    %v52 = vld [vmem:[#allocation5] sm:$0xff]
    %v53 = vld [vmem:[#allocation5 + $0x8] sm:$0xff]
    %v54 = vld [vmem:[#allocation5 + $0x10] sm:$0xff]
    %v55 = vld [vmem:[#allocation5 + $0x18] sm:$0xff]
    %v56 = vld [vmem:[#allocation5 + $0x20] sm:$0x33]
    %v57 = vld [vmem:[%s2] sm:$0x3]
    %v59 = vlaneseq
    %v60 = vshrl.u32 %v59, 7
    %v61 = vsub.s32 0, %v60
    %v62 = vrot.slane %v57, %v61
    %v63 = vlaneseq
    %v64 = vshrl.u32 %v63, 7
    %v65 = vsub.s32 1, %v64
    %v66 = vrot.slane %v57, %v65
    %v77 = vunpack.c.l.b16 %v44
    %v78 = vunpack.c.l.b16 %v45
    %v79 = vunpack.c.l.b16 %v46
    %v80 = vunpack.c.l.b16 %v47
    %v81 = vunpack.c.l.b16 %v48
    %v82 = vunpack.c.l.b16 %v49
    %v83 = vunpack.c.l.b16 %v50
    %v84 = vunpack.c.l.b16 %v51
    %v85 = vpack.c.b16 %v78, %v77
    %v86 = vpack.c.b16 %v80, %v79
    %v87 = vpack.c.b16 %v82, %v81
    %v88 = vpack.c.b16 %v84, %v83
    %v94 = vunpack.c.l.b16 %v52
    %v95 = vunpack.c.h.b16 %v52
    %v96 = vunpack.c.l.b16 %v53
    %v97 = vunpack.c.h.b16 %v53
    %v98 = vunpack.c.l.b16 %v54
    %v99 = vunpack.c.h.b16 %v54
    %v100 = vunpack.c.l.b16 %v55
    %v101 = vunpack.c.h.b16 %v55
    %v102 = vunpack.c.l.b16 %v56
    %v103 = vunpack.c.h.b16 %v56
    %v104 = vpack.c.b16 %v96, %v94
    %v105 = vpack.c.b16 %v97, %v95
    %v106 = vpack.c.b16 %v100, %v98
    %v107 = vpack.c.b16 %v101, %v99
    %v108 = vpack.c.b16 %v102, %v102
    %v109 = vpack.c.b16 %v103, %v103
    %vm114 = vcmask 293888
    %v116 = vsel %vm114, %v85, 0
    %v119 = vsel %vm114, %v86, 0
    %v122 = vsel %vm114, %v87, 0
    %v125 = vsel %vm114, %v88, 0
    %vm127 = vcmask 1041408
    %v129 = vsel %vm127, %v108, 0
    %v132 = vsel %vm127, %v109, 0
    %134 = vmatprep.subr.bf16.mxu0 %v105
    %135 = vmatpush1.bf16.msra.mxu0 %v104
    %136 = vmatprep.subr.bf16.mxu0 %v107
    %137 = vmatpush1.bf16.msra.mxu0 %v106
    %138 = vmatprep.subr.bf16.mxu0 %v132
    %139 = vmatpush1.bf16.msra.mxu0 %v129
    %140 = vmatprep.subr.bf16.mxu0 0
    %141 = vmatpush1.bf16.msra.mxu0 0
    %142 = vmatprep.subr.bf16.mxu0 0
    %143 = vmatpush1.bf16.msra.mxu0 0
    %144 = vmatprep.subr.bf16.mxu0 0
    %145 = vmatpush1.bf16.msra.mxu0 0
    %146 = vmatprep.subr.bf16.mxu0 0
    %147 = vmatpush1.bf16.msra.mxu0 0
    %148 = vmatprep.subr.bf16.mxu0 0
    %149 = vmatpush1.bf16.msra.mxu0 0
    %150 = vmatprep.subr.bf16.mxu0 0
    %151 = vmatpush1.bf16.msra.mxu0 0
    %152 = vmatprep.subr.bf16.mxu0 0
    %153 = vmatpush1.bf16.msra.mxu0 0
    %154 = vmatprep.subr.bf16.mxu0 0
    %155 = vmatpush1.bf16.msra.mxu0 0
    %156 = vmatprep.subr.bf16.mxu0 0
    %157 = vmatpush1.bf16.msra.mxu0 0
    %158 = vmatprep.subr.bf16.mxu0 0
    %159 = vmatpush1.bf16.msra.mxu0 0
    %160 = vmatprep.subr.bf16.mxu0 0
    %161 = vmatpush1.bf16.msra.mxu0 0
    %162 = vmatprep.subr.bf16.mxu0 0
    %163 = vmatpush1.bf16.msra.mxu0 0
    %164 = vmatprep.subr.bf16.mxu0 0
    %165 = vmatpush1.bf16.msra.mxu0 0
    %166 = vmatprep.mubr.bf16.mxu0 0
    %167 = vmatmul.mubr.bf16.gmra.mrb[0].mxu0 %v116
    %v168 = vpop.f32.mrb[0].mxu0
    %v169 = vadd.f32 %v62, %v168
    %v170 = vpop.f32.mrb[0].mxu0
    %v171 = vadd.f32 %v66, %v170
    %v172 = vpop.f32.mrb[0].mxu0
    %v173 = vadd.f32 %v62, %v172
    %v174 = vpop.f32.mrb[0].mxu0
    %v175 = vadd.f32 %v66, %v174
    %176 = vmatprep.mubr.bf16.mxu0 0
    %177 = vmatmul.mubr.bf16.gmra.mrb[0].mxu0 %v119
    %v178 = vpop.f32.mrb[0].mxu0
    %v179 = vadd.f32 %v62, %v178
    %v180 = vpop.f32.mrb[0].mxu0
    %v181 = vadd.f32 %v66, %v180
    %v182 = vpop.f32.mrb[0].mxu0
    %v183 = vadd.f32 %v62, %v182
    %v184 = vpop.f32.mrb[0].mxu0
    %v185 = vadd.f32 %v66, %v184
    %186 = vmatprep.mubr.bf16.mxu0 0
    %187 = vmatmul.mubr.bf16.gmra.mrb[0].mxu0 %v122
    %v188 = vpop.f32.mrb[0].mxu0
    %v189 = vadd.f32 %v62, %v188
    %v190 = vpop.f32.mrb[0].mxu0
    %v191 = vadd.f32 %v66, %v190
    %v192 = vpop.f32.mrb[0].mxu0
    %v193 = vadd.f32 %v62, %v192
    %v194 = vpop.f32.mrb[0].mxu0
    %v195 = vadd.f32 %v66, %v194
    %196 = vmatprep.mubr.bf16.mxu0 0
    %197 = vmatmul.mubr.bf16.gmra.mrb[0].mxu0 %v125
    %v198 = vpop.f32.mrb[0].mxu0
    %v199 = vadd.f32 %v62, %v198
    %v200 = vpop.f32.mrb[0].mxu0
    %v201 = vadd.f32 %v66, %v200
    %v202 = vpop.f32.mrb[0].mxu0
    %v203 = vadd.f32 %v62, %v202
    %v204 = vpop.f32.mrb[0].mxu0
    %v205 = vadd.f32 %v66, %v204
    %206 = vdwg.mxu0
    %v207 = vxor.u32 %v169, 2147483648
    %v208 = vxor.u32 %v173, 2147483648
    %v209 = vxor.u32 %v179, 2147483648
    %v210 = vxor.u32 %v183, 2147483648
    %v211 = vxor.u32 %v189, 2147483648
    %v212 = vxor.u32 %v193, 2147483648
    %v213 = vxor.u32 %v199, 2147483648
    %v214 = vxor.u32 %v203, 2147483648
    %v215 = vmul.f32 %v207, 1.442695
    %v216 = vpow.pop %v215
    %v217 = vmul.f32 %v208, 1.442695
    %v218 = vpow.pop %v217
    %v219 = vmul.f32 %v209, 1.442695
    %v220 = vpow.pop %v219
    %v221 = vmul.f32 %v210, 1.442695
    %v222 = vpow.pop %v221
    %v223 = vmul.f32 %v211, 1.442695
    %v224 = vpow.pop %v223
    %v225 = vmul.f32 %v212, 1.442695
    %v226 = vpow.pop %v225
    %v227 = vmul.f32 %v213, 1.442695
    %v228 = vpow.pop %v227
    %v229 = vmul.f32 %v214, 1.442695
    %v230 = vpow.pop %v229
    %v231 = vadd.f32 %v216, 1.0
    %v232 = vadd.f32 %v218, 1.0
    %v233 = vadd.f32 %v220, 1.0
    %v234 = vadd.f32 %v222, 1.0
    %v235 = vadd.f32 %v224, 1.0
    %v236 = vadd.f32 %v226, 1.0
    %v237 = vadd.f32 %v228, 1.0
    %v238 = vadd.f32 %v230, 1.0
    %v239 = vrcp.pop %v231
    %v240 = vmul.f32 1.0, %v239
    %v241 = vrcp.pop %v232
    %v242 = vmul.f32 1.0, %v241
    %v243 = vrcp.pop %v233
    %v244 = vmul.f32 1.0, %v243
    %v245 = vrcp.pop %v234
    %v246 = vmul.f32 1.0, %v245
    %v247 = vrcp.pop %v235
    %v248 = vmul.f32 1.0, %v247
    %v249 = vrcp.pop %v236
    %v250 = vmul.f32 1.0, %v249
    %v251 = vrcp.pop %v237
    %v252 = vmul.f32 1.0, %v251
    %v253 = vrcp.pop %v238
    %v254 = vmul.f32 1.0, %v253
    %v255 = vtanh.pop %v171
    %v256 = vtanh.pop %v175
    %v257 = vtanh.pop %v181
    %v258 = vtanh.pop %v185
    %v259 = vtanh.pop %v191
    %v260 = vtanh.pop %v195
    %v261 = vtanh.pop %v201
    %v262 = vtanh.pop %v205
    %v263 = vmul.f32 %v240, %v255
    %v264 = vmul.f32 %v242, %v256
    %v265 = vmul.f32 %v244, %v257
    %v266 = vmul.f32 %v246, %v258
    %v267 = vmul.f32 %v248, %v259
    %v268 = vmul.f32 %v250, %v260
    %v269 = vmul.f32 %v252, %v261
    %v270 = vmul.f32 %v254, %v262
    %v271 = vrot.slane %v263, 4
    %v272 = vadd.f32 %v263, %v271
    %v273 = vrot.slane %v272, 2
    %v274 = vadd.f32 %v272, %v273
    %v275 = vrot.slane %v274, 1
    %v276 = vadd.f32 %v274, %v275
    %v277 = vrot.slane %v264, 4
    %v278 = vadd.f32 %v264, %v277
    %v279 = vrot.slane %v278, 2
    %v280 = vadd.f32 %v278, %v279
    %v281 = vrot.slane %v280, 1
    %v282 = vadd.f32 %v280, %v281
    %v283 = vrot.slane %v265, 4
    %v284 = vadd.f32 %v265, %v283
    %v285 = vrot.slane %v284, 2
    %v286 = vadd.f32 %v284, %v285
    %v287 = vrot.slane %v286, 1
    %v288 = vadd.f32 %v286, %v287
    %v289 = vrot.slane %v266, 4
    %v290 = vadd.f32 %v266, %v289
    %v291 = vrot.slane %v290, 2
    %v292 = vadd.f32 %v290, %v291
    %v293 = vrot.slane %v292, 1
    %v294 = vadd.f32 %v292, %v293
    %v295 = vrot.slane %v267, 4
    %v296 = vadd.f32 %v267, %v295
    %v297 = vrot.slane %v296, 2
    %v298 = vadd.f32 %v296, %v297
    %v299 = vrot.slane %v298, 1
    %v300 = vadd.f32 %v298, %v299
    %v301 = vrot.slane %v268, 4
    %v302 = vadd.f32 %v268, %v301
    %v303 = vrot.slane %v302, 2
    %v304 = vadd.f32 %v302, %v303
    %v305 = vrot.slane %v304, 1
    %v306 = vadd.f32 %v304, %v305
    %v307 = vrot.slane %v269, 4
    %v308 = vadd.f32 %v269, %v307
    %v309 = vrot.slane %v308, 2
    %v310 = vadd.f32 %v308, %v309
    %v311 = vrot.slane %v310, 1
    %v312 = vadd.f32 %v310, %v311
    %v313 = vrot.slane %v270, 4
    %v314 = vadd.f32 %v270, %v313
    %v315 = vrot.slane %v314, 2
    %v316 = vadd.f32 %v314, %v315
    %v317 = vrot.slane %v316, 1
    %v318 = vadd.f32 %v316, %v317
    %vm327 = vcmask 1041409
    %v328 = vsel %vm327, %v282, %v276
    %vm329 = vcmask 1042434
    %v330 = vsel %vm329, %v288, %v328
    %vm331 = vcmask 1043459
    %v332 = vsel %vm331, %v294, %v330
    %vm333 = vcmask 1044484
    %v334 = vsel %vm333, %v300, %v332
    %vm335 = vcmask 1045509
    %v336 = vsel %vm335, %v306, %v334
    %vm337 = vcmask 1046534
    %v338 = vsel %vm337, %v312, %v336
    %vm339 = vcmask 1047559
    %v340 = vsel %vm339, %v318, %v338
    %342 = vst [vmem:[#allocation7] sm:$0xff] %v340
    // Predicated region
    $region22: #{tpu_custom_call.1} parent=1 // pred_check
      _
    $region23: #{tpu_custom_call.1} parent=1 // pred_check_branch
      %344 = sbr.rel (0) target = $region25
    $region24: #{tpu_custom_call.1} parent=1 // pred_region
      %s346 = ssub.s32 128, 128
      %347 = vsyncadd [#allocation4], %s346
      %s349 = sshll.u32 [#allocation7], 4
      %s350 = int_to_ptr.vmem [resolvable:$true] %s349
      %352 = dma.vmem_to_hbm [thread:$0]  %s350, 128, %s3, [#allocation4]
    $region25: #{tpu_custom_call.1} parent=1 // pred_fallthru
      _
    // Predicated region
    $region26: #{tpu_custom_call.1} parent=1 // pred_check
      _
    $region27: #{tpu_custom_call.1} parent=1 // pred_check_branch
      %354 = sbr.rel (0) target = $region29
    $region28: #{tpu_custom_call.1} parent=1 // pred_region
      %355 = dma.done [#allocation4], 128
    $region29: #{tpu_custom_call.1} parent=1 // pred_fallthru
      _
    %356 = vsyncpa [#allocation3], 1
    %357 = vsyncpa [#allocation6], 1
    %358 = vsyncpa [#allocation4], 1

</llo_original>
